<compile_context>
chip_gen: v6e
topology: v6e:2x2x1
jax: 0.10.0
libtpu: 0.0.40
codegen_flags: <defaults>
</compile_context>

<pallas_src>
import jax
import jax.numpy as jnp
from jax import lax
from jax.experimental import pallas as pl
from jax.experimental.pallas import tpu as pltpu


def _critic_head_kernel(b_ref, x_ref, w_ref, o_ref, acc_ref):
    # b_ref:   (1,) f32 in SMEM (scalar prefetch)
    # x_ref:   (TILE_B, D) tile of the input
    # w_ref:   (1, D) lane-dense f32 weight row, resident across the grid
    # o_ref:   (TILE_B, 1) output tile
    # acc_ref: (TILE_B, 128) f32 VMEM partial-sum scratch
    tb, D = x_ref.shape
    n_full, rem = divmod(D, 128)

    if n_full > 0:
        acc_ref[...] = jnp.zeros_like(acc_ref)

        def body(j, carry):
            c = pl.multiple_of(j * 128, 128)
            xc = x_ref[:, pl.ds(c, 128)]          # (tb, 128), x dtype
            wc = w_ref[:, pl.ds(c, 128)]          # (1, 128), f32
            acc_ref[...] += (xc * wc).astype(jnp.float32)  # widening mul, VALU
            return carry

        lax.fori_loop(0, n_full, body, 0,
                      unroll=True if n_full <= 16 else 8)
        row = jnp.sum(acc_ref[...], axis=-1, keepdims=True)  # (tb, 1), XLU
    else:
        row = jnp.zeros((tb, 1), jnp.float32)

    if rem > 0:
        xt = x_ref[:, n_full * 128:]              # (tb, rem)
        wt = w_ref[:, n_full * 128:]              # (1, rem)
        row = row + jnp.sum((xt * wt).astype(jnp.float32),
                            axis=-1, keepdims=True)

    o_ref[...] = (row + b_ref[0]).astype(o_ref.dtype)


def critic_head_forward(x, weight, bias, *, tile_b=None):
    """Equivalent of torch nn.Linear(D, 1): x @ weight.T + bias.

    x: (B, D), weight: (1, D), bias: (1,). Returns (B, 1) in x.dtype.
    """
    B, D = x.shape
    itemsize = jnp.dtype(x.dtype).itemsize
    out_itemsize = itemsize

    # ---- generation-aware VMEM budget -------------------------------------
    try:
        vmem_cap = int(getattr(pltpu.get_tpu_info(), "vmem_capacity_bytes", 0))
    except Exception:  # pragma: no cover - trace-time query may be unavailable
        vmem_cap = 0
    # Small-VMEM chip (v7x: 64 MiB physical) or unknown -> conservative budget.
    small_vmem = (vmem_cap == 0) or (vmem_cap <= 64 * 1024 * 1024)
    if small_vmem:
        pipeline_budget = 28 * 1024 * 1024   # double-buffered x + out + scratch
        vmem_limit = 40 * 1024 * 1024
    else:
        pipeline_budget = 48 * 1024 * 1024
        vmem_limit = 64 * 1024 * 1024

    # ---- tile selection: size by bytes, multiple of 8 ----------------------
    if tile_b is None:
        # per-row VMEM cost:
        #   2x x block (double-buffered) + 2x lane-padded out block
        #   + f32 (tb,128) partial scratch + ~2 per-chunk (tb,128) f32 temps
        row_bytes = (2 * D * itemsize) + (2 * 128 * out_itemsize) \
                    + (128 * 4) + (2 * 128 * 4)
        tile_b = pipeline_budget // row_bytes

    if B < 8:
        tile_b = B                                   # block == full batch dim
    else:
        tile_b = max(8, min((int(tile_b) // 8) * 8, (B // 8) * 8))
        if small_vmem and B > 8:
            # guarantee >= 2 grid steps so the parallel batch axis can shard
            # across v7x's two TensorCores
            half8 = ((-(-B // 2)) + 7) // 8 * 8
            tile_b = min(tile_b, max(8, half8))

    grid = (pl.cdiv(B, tile_b),)

    w = weight.reshape(1, D).astype(jnp.float32)     # lane-dense, cast once
    b = bias.reshape(1).astype(jnp.float32)          # -> SMEM scalar

    cost = pl.CostEstimate(
        flops=2 * B * D,
        bytes_accessed=B * D * itemsize + D * 4 + B * out_itemsize + 4,
        transcendentals=0,
    )

    out = pl.pallas_call(
        _critic_head_kernel,
        out_shape=jax.ShapeDtypeStruct((B, 1), x.dtype),
        grid_spec=pltpu.PrefetchScalarGridSpec(
            num_scalar_prefetch=1,                    # bias -> SMEM
            grid=grid,
            in_specs=[
                pl.BlockSpec((tile_b, D), lambda i, b_sc: (i, 0)),
                pl.BlockSpec((1, D), lambda i, b_sc: (0, 0)),     # resident
            ],
            out_specs=pl.BlockSpec((tile_b, 1), lambda i, b_sc: (i, 0)),
            scratch_shapes=[pltpu.VMEM((tile_b, 128), jnp.float32)],
        ),
        compiler_params=pltpu.CompilerParams(
            dimension_semantics=("parallel",),
            vmem_limit_bytes=vmem_limit,
        ),
        cost_estimate=cost,
    )(b, x, w)

    return out


def init_critic_head_params(input_size, key):
    """Deterministic stand-in for nn.init.orthogonal_ on a (1, input_size)
    weight: a unit-norm row vector (what orthogonal init yields for a single
    row). Bias is zero-initialized (nn.init.constant_(bias, 0))."""
    v = jax.random.normal(key, (1, input_size), dtype=jnp.float32)
    weight = v / jnp.linalg.norm(v)
    bias = jnp.zeros((1,), dtype=jnp.float32)
    return weight, bias


if __name__ == "__main__":
    key = jax.random.PRNGKey(0)
    k_x, k_w, k_x2, k_w2 = jax.random.split(key, 4)

    # small shape consistent with the module
    batch, hidden = 8, 32
    x = jax.random.normal(k_x, (batch, hidden), dtype=jnp.float32)
    weight, bias = init_critic_head_params(hidden, k_w)

    out = critic_head_forward(x, weight, bias)
    jax.block_until_ready(out)
    ref = x @ weight.T + bias
    assert out.shape == (batch, 1)
    assert jnp.allclose(out, ref, atol=1e-5), "mismatch vs reference"

    # second check: ragged batch + D with both full 128-chunks and a tail,
    # exercising the ragged last grid block and the chunked fori_loop path.
    b2, d2 = 37, 160
    x2 = jax.random.normal(k_x2, (b2, d2), dtype=jnp.float32)
    w2, bias2 = init_critic_head_params(d2, k_w2)
    out2 = critic_head_forward(x2, w2, bias2, tile_b=32)
    jax.block_until_ready(out2)
    ref2 = x2 @ w2.T + bias2
    assert out2.shape == (b2, 1)
    assert jnp.allclose(out2, ref2, atol=1e-5), "mismatch vs reference (ragged)"

    print("KERNEL_OK")
</pallas_src>

<mosaic_0001>
module attributes {stable_mosaic.version = 11 : i64} {
  func.func @_critic_head_kernel(%arg0: i32, %arg1: memref<1xf32, #tpu.memory_space<smem>>, %arg2: memref<8x32xf32, #tpu.memory_space<vmem>>, %arg3: memref<1x32xf32, #tpu.memory_space<vmem>>, %arg4: memref<8x1xf32, #tpu.memory_space<vmem>>, %arg5: memref<8x128xf32, #tpu.memory_space<vmem>>) attributes {dimension_semantics = [#tpu.dimension_semantics<parallel>], iteration_bounds = array<i64: 1>, scalar_prefetch = 1 : i64, scratch_operands = 1 : i64, tpu.core_type = #tpu.core_type<tc>, window_params = [{transform_indices = @transform_0, window_bounds = array<i64: 8, 32>}, {pipeline_mode = #tpu.pipeline_mode<synchronous>, transform_indices = @transform_1, window_bounds = array<i64: 1, 32>}, {transform_indices = @transform_2, window_bounds = array<i64: 8, 1>}]} {
    %cst = arith.constant 0.000000e+00 : f32
    %0 = vector.broadcast %cst : f32 to vector<8x1xf32>
    %c0 = arith.constant 0 : index
    %c0_0 = arith.constant 0 : index
    %1 = vector.load %arg2[%c0, %c0_0] : memref<8x32xf32, #tpu.memory_space<vmem>>, vector<8x32xf32>
    %c0_1 = arith.constant 0 : index
    %c0_2 = arith.constant 0 : index
    %2 = vector.load %arg3[%c0_1, %c0_2] : memref<1x32xf32, #tpu.memory_space<vmem>>, vector<1x32xf32>
    %3 = vector.broadcast %2 : vector<1x32xf32> to vector<8x32xf32>
    %4 = arith.mulf %1, %3 : vector<8x32xf32>
    %cst_3 = arith.constant dense<0.000000e+00> : vector<8xf32>
    %5 = vector.multi_reduction <add>, %4, %cst_3 [1] : vector<8x32xf32> to vector<8xf32>
    %6 = vector.shape_cast %5 : vector<8xf32> to vector<8x1xf32>
    %7 = arith.addf %0, %6 : vector<8x1xf32>
    %c0_4 = arith.constant 0 : index
    %8 = memref.load %arg1[%c0_4] : memref<1xf32, #tpu.memory_space<smem>>
    %9 = vector.broadcast %8 : f32 to vector<8x1xf32>
    %10 = arith.addf %7, %9 : vector<8x1xf32>
    %c0_5 = arith.constant 0 : index
    %c0_6 = arith.constant 0 : index
    %11 = vector.load %arg4[%c0_5, %c0_6] : memref<8x1xf32, #tpu.memory_space<vmem>>, vector<8x1xf32>
    tpu.vector_store %arg4[%c0_5, %c0_6], %10 {strides = array<i32>} : memref<8x1xf32, #tpu.memory_space<vmem>>, vector<8x1xf32>,
    return
  }
  func.func @transform_0(%arg0: i32, %arg1: memref<1xf32, #tpu.memory_space<smem>>) -> (i32, i32) {
    %c0_i32 = arith.constant 0 : i32
    %c0_i32_0 = arith.constant 0 : i32
    return %arg0, %c0_i32 : i32, i32
  }
  func.func @transform_1(%arg0: i32, %arg1: memref<1xf32, #tpu.memory_space<smem>>) -> (i32, i32) {
    %c0_i32 = arith.constant 0 : i32
    %c0_i32_0 = arith.constant 0 : i32
    %c0_i32_1 = arith.constant 0 : i32
    return %c0_i32, %c0_i32_0 : i32, i32
  }
  func.func @transform_2(%arg0: i32, %arg1: memref<1xf32, #tpu.memory_space<smem>>) -> (i32, i32) {
    %c0_i32 = arith.constant 0 : i32
    %c0_i32_0 = arith.constant 0 : i32
    return %arg0, %c0_i32 : i32, i32
  }
}

</mosaic_0001>

<llo_original>
// kernel: tpu_custom_call.1
$region0: #{tpu_custom_call.1}
  #allocation0 [shape = 'u32[]', space=smem, size = 0x4, offset = 0x4, fixed_abs, tag = 'smem constant byte address 0x4 - core index']
  #allocation1 [shape = 'u32[144,128]{1,0:T(1,128)}', space=vmem, size = 0x12000, scoped, tag = 'internal scratch']
  #allocation2 [shape = 'f32[8,128]{1,0:T(8,128)}', space=vmem, size = 0x1000, scoped, tag = 'scratch operand']
  #allocation3 [shape = 's32[1]{0}', space=sflag, size = 0x4, scoped, tag = 'scoped memory for tpu_custom_call.1']
  #allocation4 [shape = 'f32[1]{0:T(128)S(6)}', space=smem, size = 0x200, scoped, tag = 'prefetched SMEM operand 0']
  %s0 = inlined_call_operand.<no memory space> [shape: f32[1], index: 0, kind: input, shape index: {}]
  %s1 = inlined_call_operand.hbm [shape: f32[8,32], index: 1, kind: input, shape index: {}]
  %s2 = inlined_call_operand.vmem [shape: f32[1,32], index: 2, kind: input, shape index: {}]
  %s3 = inlined_call_operand.vmem [shape: f32[8,1], index: 3, kind: output, shape index: {}]
  %s4 = sld [smem:[#allocation0]]
  $region22: #{tpu_custom_call.1} parent=0
    _
  %s6 = ssub.s32 1, %s4
  %s7 = scalar_select 0, %s6, %s4
  %8 = sst [smem:[#allocation4]] %s0
  $region1: #{tpu_custom_call.1} parent=0
    #allocation5 [shape = 'u8[4096]{0}', space=vmem, size = 0x1000, scoped, tag = 'input window, operand 1, single buffered']
    #allocation6 [shape = 's32[1]{0}', space=sflag, size = 0x4, scoped, tag = 'scoped memory for tpu_custom_call.1']
    %9 = vsyncpa [#allocation6], 0
    // Predicated region
    $region2: #{tpu_custom_call.1} parent=1 // pred_check
      _
    $region3: #{tpu_custom_call.1} parent=1 // pred_check_branch
      %11 = sbr.rel (0) target = $region5
    $region4: #{tpu_custom_call.1} parent=1 // pred_region
      %s13 = ssub.s32 128, 128
      %14 = vsyncadd [#allocation6], %s13
      %s16 = sshll.u32 [#allocation5], 4
      %s17 = int_to_ptr.vmem [resolvable:$true] %s16
      %19 = dma.hbm_to_vmem [thread:$0]  %s1, 128, %s17, [#allocation6]
    $region5: #{tpu_custom_call.1} parent=1 // pred_fallthru
      _
    // Predicated region
    $region6: #{tpu_custom_call.1} parent=1 // pred_check
      _
    $region7: #{tpu_custom_call.1} parent=1 // pred_check_branch
      %21 = sbr.rel (0) target = $region9
    $region8: #{tpu_custom_call.1} parent=1 // pred_region
      _
    $region9: #{tpu_custom_call.1} parent=1 // pred_fallthru
      _
    // Predicated region
    $region10: #{tpu_custom_call.1} parent=1 // pred_check
      _
    $region11: #{tpu_custom_call.1} parent=1 // pred_check_branch
      %23 = sbr.rel (0) target = $region13
    $region12: #{tpu_custom_call.1} parent=1 // pred_region
      %24 = dma.done [#allocation6], 128
    $region13: #{tpu_custom_call.1} parent=1 // pred_fallthru
      _
    %v25 = vld [vmem:[#allocation5] sm:$0xff]
    %v26 = vld [vmem:[%s2] sm:$0x1]
    %v28 = vlaneseq
    %v29 = vshrl.u32 %v28, 7
    %v30 = vsub.s32 0, %v29
    %v31 = vrot.slane %v26, %v30
    %v33 = vmul.f32 %v25, %v31
    %vm34 = vcmask 261120
    %v35 = vsel %vm34, %v33, 0.0
    %36 = vadd.xlane.f32.xlu0 %v35
    %v37 = vpop.xlane.xlu0 %36
    %v38 = vadd.f32 %v37, 0.0
    %s39 = sld [smem:[#allocation4]]
    %v40 = vstv %s39
    %v41 = vadd.f32 %v38, %v40
    %vm42 = vcmask 7168
    %43 = vst.msk [vmem:[%s3] sm:$0xff] %vm42, %v41
    // Predicated region
    $region14: #{tpu_custom_call.1} parent=1 // pred_check
      _
    $region15: #{tpu_custom_call.1} parent=1 // pred_check_branch
      %45 = sbr.rel (0) target = $region17
    $region16: #{tpu_custom_call.1} parent=1 // pred_region
      _
    $region17: #{tpu_custom_call.1} parent=1 // pred_fallthru
      _
    // Predicated region
    $region18: #{tpu_custom_call.1} parent=1 // pred_check
      _
    $region19: #{tpu_custom_call.1} parent=1 // pred_check_branch
      %47 = sbr.rel (0) target = $region21
    $region20: #{tpu_custom_call.1} parent=1 // pred_region
      _
    $region21: #{tpu_custom_call.1} parent=1 // pred_fallthru
      _
    %48 = vsyncpa [#allocation6], 1

</llo_original>
